<compile_context>
chip_gen: v7x
topology: tpu7x:2x2x1
jax: 0.10.0
libtpu: 0.0.40
codegen_flags: <defaults>
</compile_context>

<pallas_src>
import math

import jax
import jax.numpy as jnp
from jax.experimental import pallas as pl
from jax.experimental.pallas import tpu as pltpu

EPS = 1e-5


def _ln_tile(x_raw, w):
    # LayerNorm over the last (lane) axis of a (rows, C) tile; compute in f32.
    x = x_raw.astype(jnp.float32)
    mu = jnp.mean(x, axis=-1, keepdims=True)
    xc = x - mu
    var = jnp.mean(xc * xc, axis=-1, keepdims=True)
    return xc * jax.lax.rsqrt(var + EPS) * w


def _ln_kernel_nobias(x_ref, w_ref, o_ref):
    o_ref[...] = _ln_tile(x_ref[...], w_ref[...]).astype(o_ref.dtype)


def _ln_kernel_bias(x_ref, w_ref, b_ref, o_ref):
    o_ref[...] = (_ln_tile(x_ref[...], w_ref[...]) + b_ref[...]).astype(o_ref.dtype)


def _pick_block_rows(n_rows, n_cols, max_block_rows):
    # Target ~4 MiB of f32 compute tile per buffer so (in + out + f32 temps)
    # stay comfortably inside the scoped-VMEM limit even for wide hidden dims.
    vmem_budget_rows = max(8, (4 * 1024 * 1024) // (4 * max(n_cols, 1)))
    cap = min(max_block_rows, vmem_budget_rows)
    if n_rows <= cap:
        block_rows = max(8, ((n_rows + 7) // 8) * 8)
    else:
        block_rows = (cap // 8) * 8
    return max(8, block_rows)


def layer_norm(x, weight, bias=None, *, max_block_rows=512):
    """Equivalent of F.layer_norm(x, (C,), weight, bias, eps=1e-5)."""
    orig_shape = x.shape
    orig_dtype = x.dtype
    C = orig_shape[-1]
    N = math.prod(orig_shape[:-1]) if len(orig_shape) > 1 else 1

    # Flatten all leading dims into a single sublane-dense row axis.
    # NOTE: keep original dtype — the f32 cast happens inside the kernel.
    xf = x.reshape(N, C)

    block_rows = _pick_block_rows(N, C, max_block_rows)
    pad = (-N) % block_rows
    if pad:
        xf = jnp.pad(xf, ((0, pad), (0, 0)))  # padded rows are discarded below
    n_rows = N + pad
    grid = (n_rows // block_rows,)

    w2 = weight.reshape(1, C).astype(jnp.float32)
    row_spec = pl.BlockSpec((block_rows, C), lambda i: (i, 0))
    vec_spec = pl.BlockSpec((1, C), lambda i: (0, 0))

    if bias is None:
        kernel = _ln_kernel_nobias
        args = (xf, w2)
        in_specs = [row_spec, vec_spec]
    else:
        kernel = _ln_kernel_bias
        args = (xf, w2, bias.reshape(1, C).astype(jnp.float32))
        in_specs = [row_spec, vec_spec, vec_spec]

    out = pl.pallas_call(
        kernel,
        out_shape=jax.ShapeDtypeStruct((n_rows, C), orig_dtype),
        grid=grid,
        in_specs=in_specs,
        out_specs=row_spec,
        compiler_params=pltpu.CompilerParams(dimension_semantics=("parallel",)),
    )(*args)

    return out[:N].reshape(orig_shape)


# ------------------------- pure-JAX reference ---------------------------------
def ref_layer_norm(x, weight, bias=None):
    xf = x.astype(jnp.float32)
    mu = jnp.mean(xf, axis=-1, keepdims=True)
    var = jnp.mean((xf - mu) ** 2, axis=-1, keepdims=True)
    y = (xf - mu) / jnp.sqrt(var + EPS) * weight
    if bias is not None:
        y = y + bias
    return y.astype(x.dtype)


if __name__ == "__main__":
    key = jax.random.PRNGKey(0)
    k1, k2, k3, k4, k5 = jax.random.split(key, 5)

    # Case 1: GPT-style usage — (B, T, C) activations, bias=False, ones weight.
    B, T, C = 2, 8, 64
    x1 = jax.random.normal(k1, (B, T, C), jnp.float32)
    w1 = jnp.ones((C,), jnp.float32)  # module init: torch.ones(n_embed)
    y1 = jax.block_until_ready(layer_norm(x1, w1))
    r1 = ref_layer_norm(x1, w1)
    assert y1.shape == (B, T, C)
    assert jnp.allclose(y1, r1, atol=1e-4, rtol=1e-4), \
        f"max abs diff {float(jnp.max(jnp.abs(y1 - r1)))}"

    # Case 2: bias=True, lane-dense C=128, non-multiple-of-8 row count (padding path).
    B2, T2, C2 = 3, 5, 128
    x2 = jax.random.normal(k2, (B2, T2, C2), jnp.float32)
    w2 = 1.0 + 0.1 * jax.random.normal(k3, (C2,), jnp.float32)
    b2 = 0.1 * jax.random.normal(k4, (C2,), jnp.float32)
    y2 = jax.block_until_ready(layer_norm(x2, w2, b2))
    r2 = ref_layer_norm(x2, w2, b2)
    assert y2.shape == (B2, T2, C2)
    assert jnp.allclose(y2, r2, atol=1e-4, rtol=1e-4), \
        f"max abs diff {float(jnp.max(jnp.abs(y2 - r2)))}"

    # Case 3: bf16 activations (in-kernel f32 compute, bf16 in/out DMA).
    B3, T3, C3 = 2, 16, 32
    x3 = jax.random.normal(k5, (B3, T3, C3), jnp.float32).astype(jnp.bfloat16)
    w3 = jnp.ones((C3,), jnp.float32)
    y3 = jax.block_until_ready(layer_norm(x3, w3))
    r3 = ref_layer_norm(x3, w3)
    assert y3.dtype == jnp.bfloat16 and y3.shape == (B3, T3, C3)
    assert jnp.allclose(y3.astype(jnp.float32), r3.astype(jnp.float32),
                        atol=2e-2, rtol=2e-2)

    print("KERNEL_OK")
</pallas_src>

<mosaic_0001>
module attributes {stable_mosaic.version = 11 : i64} {
  func.func @_ln_kernel_nobias(%arg0: i32, %arg1: memref<16x64xf32, #tpu.memory_space<vmem>>, %arg2: memref<1x64xf32, #tpu.memory_space<vmem>>, %arg3: memref<16x64xf32, #tpu.memory_space<vmem>>) attributes {dimension_semantics = [#tpu.dimension_semantics<parallel>], iteration_bounds = array<i64: 1>, scalar_prefetch = 0 : i64, scratch_operands = 0 : i64, tpu.core_type = #tpu.core_type<tc>, window_params = [{transform_indices = @transform_0, window_bounds = array<i64: 16, 64>}, {pipeline_mode = #tpu.pipeline_mode<synchronous>, transform_indices = @transform_1, window_bounds = array<i64: 1, 64>}, {transform_indices = @transform_2, window_bounds = array<i64: 16, 64>}]} {
    %c0 = arith.constant 0 : index
    %c0_0 = arith.constant 0 : index
    %0 = vector.load %arg1[%c0, %c0_0] : memref<16x64xf32, #tpu.memory_space<vmem>>, vector<16x64xf32>
    %c0_1 = arith.constant 0 : index
    %c0_2 = arith.constant 0 : index
    %1 = vector.load %arg2[%c0_1, %c0_2] : memref<1x64xf32, #tpu.memory_space<vmem>>, vector<1x64xf32>
    %cst = arith.constant dense<0.000000e+00> : vector<16xf32>
    %2 = vector.multi_reduction <add>, %0, %cst [1] : vector<16x64xf32> to vector<16xf32>
    %3 = vector.shape_cast %2 : vector<16xf32> to vector<16x1xf32>
    %cst_3 = arith.constant 6.400000e+01 : f32
    %4 = vector.broadcast %cst_3 : f32 to vector<16x1xf32>
    %5 = arith.divf %3, %4 : vector<16x1xf32>
    %6 = vector.broadcast %5 : vector<16x1xf32> to vector<16x64xf32>
    %7 = arith.subf %0, %6 : vector<16x64xf32>
    %8 = arith.mulf %7, %7 : vector<16x64xf32>
    %cst_4 = arith.constant dense<0.000000e+00> : vector<16xf32>
    %9 = vector.multi_reduction <add>, %8, %cst_4 [1] : vector<16x64xf32> to vector<16xf32>
    %10 = vector.shape_cast %9 : vector<16xf32> to vector<16x1xf32>
    %cst_5 = arith.constant 6.400000e+01 : f32
    %11 = vector.broadcast %cst_5 : f32 to vector<16x1xf32>
    %12 = arith.divf %10, %11 : vector<16x1xf32>
    %cst_6 = arith.constant 9.99999974E-6 : f32
    %13 = vector.broadcast %cst_6 : f32 to vector<16x1xf32>
    %14 = arith.addf %12, %13 : vector<16x1xf32>
    %15 = math.rsqrt %14 : vector<16x1xf32>
    %16 = vector.broadcast %15 : vector<16x1xf32> to vector<16x64xf32>
    %17 = arith.mulf %7, %16 : vector<16x64xf32>
    %18 = vector.broadcast %1 : vector<1x64xf32> to vector<16x64xf32>
    %19 = arith.mulf %17, %18 : vector<16x64xf32>
    %c0_7 = arith.constant 0 : index
    %c0_8 = arith.constant 0 : index
    %20 = vector.load %arg3[%c0_7, %c0_8] : memref<16x64xf32, #tpu.memory_space<vmem>>, vector<16x64xf32>
    tpu.vector_store %arg3[%c0_7, %c0_8], %19 {strides = array<i32>} : memref<16x64xf32, #tpu.memory_space<vmem>>, vector<16x64xf32>,
    return
  }
  func.func @transform_0(%arg0: i32) -> (i32, i32) {
    %c0_i32 = arith.constant 0 : i32
    %c0_i32_0 = arith.constant 0 : i32
    return %arg0, %c0_i32 : i32, i32
  }
  func.func @transform_1(%arg0: i32) -> (i32, i32) {
    %c0_i32 = arith.constant 0 : i32
    %c0_i32_0 = arith.constant 0 : i32
    %c0_i32_1 = arith.constant 0 : i32
    return %c0_i32, %c0_i32_0 : i32, i32
  }
  func.func @transform_2(%arg0: i32) -> (i32, i32) {
    %c0_i32 = arith.constant 0 : i32
    %c0_i32_0 = arith.constant 0 : i32
    return %arg0, %c0_i32 : i32, i32
  }
}

</mosaic_0001>

<llo_original>
// kernel: tpu_custom_call.1
$region0: #{tpu_custom_call.1}
  #allocation0 [shape = 'u32[]', space=smem, size = 0x4, offset = 0x4, fixed_abs, tag = 'smem constant byte address 0x4 - core index']
  #allocation1 [shape = 'u32[144,128]{1,0:T(1,128)}', space=vmem, size = 0x12000, scoped, tag = 'internal scratch']
  %s0 = inlined_call_operand.hbm [shape: f32[16,64], index: 0, kind: input, shape index: {}]
  %s1 = inlined_call_operand.vmem [shape: f32[1,64], index: 1, kind: input, shape index: {}]
  %s2 = inlined_call_operand.hbm [shape: f32[16,64], index: 2, kind: output, shape index: {}]
  %s3 = sld [smem:[#allocation0]]
  $region22: #{tpu_custom_call.1} parent=0
    _
  %s5 = ssub.s32 1, %s3
  %s6 = scalar_select 0, %s5, %s3
  $region1: #{tpu_custom_call.1} parent=0
    #allocation2 [shape = 'u8[8192]{0}', space=vmem, size = 0x2000, scoped, tag = 'input window, operand 0, single buffered']
    #allocation3 [shape = 's32[1]{0}', space=sflag, size = 0x4, scoped, tag = 'scoped memory for tpu_custom_call.1']
    #allocation4 [shape = 's32[1]{0}', space=sflag, size = 0x4, scoped, tag = 'scoped memory for tpu_custom_call.1']
    #allocation5 [shape = 'u8[8192]{0}', space=vmem, size = 0x2000, scoped, tag = 'output window, operand 0, single buffered']
    %7 = vsyncpa [#allocation3], 0
    %8 = vsyncpa [#allocation4], 0
    // Predicated region
    $region2: #{tpu_custom_call.1} parent=1 // pred_check
      _
    $region3: #{tpu_custom_call.1} parent=1 // pred_check_branch
      %10 = sbr.rel (0) target = $region5
    $region4: #{tpu_custom_call.1} parent=1 // pred_region
      %s12 = ssub.s32 256, 256
      %13 = vsyncadd [#allocation3], %s12
      %s14 = sshll.u32 [#allocation2], 4
      %s15 = int_to_ptr.vmem [resolvable:$true] %s14
      %20 = dma.hbm_to_vmem [thread:$0]  %s0, 256, %s15, [#allocation3], 128, 128, 8
    $region5: #{tpu_custom_call.1} parent=1 // pred_fallthru
      _
    // Predicated region
    $region6: #{tpu_custom_call.1} parent=1 // pred_check
      _
    $region7: #{tpu_custom_call.1} parent=1 // pred_check_branch
      %22 = sbr.rel (0) target = $region9
    $region8: #{tpu_custom_call.1} parent=1 // pred_region
      _
    $region9: #{tpu_custom_call.1} parent=1 // pred_fallthru
      _
    // Predicated region
    $region10: #{tpu_custom_call.1} parent=1 // pred_check
      _
    $region11: #{tpu_custom_call.1} parent=1 // pred_check_branch
      %24 = sbr.rel (0) target = $region13
    $region12: #{tpu_custom_call.1} parent=1 // pred_region
      %25 = dma.done [#allocation3], 256
    $region13: #{tpu_custom_call.1} parent=1 // pred_fallthru
      _
    %v26 = vld [vmem:[#allocation2] sm:$0xff]
    %v27 = vld [vmem:[#allocation2 + $0x8] sm:$0xff]
    %v28 = vld [vmem:[%s1] sm:$0x1]
    %vm29 = vcmask 523264
    %v30 = vsel %vm29, %v26, 0.0
    %31 = vadd.xlane.f32.xlu0 %v30
    %v32 = vpop.xlane.xlu0 %31
    %v33 = vsel %vm29, %v27, 0.0
    %34 = vadd.xlane.f32.xlu0 %v33
    %v35 = vpop.xlane.xlu0 %34
    %v36 = vrcp.pop 64.0
    %v37 = vmul.f32 %v32, %v36
    %v38 = vmul.f32 %v35, %v36
    %v39 = vsub.f32 %v26, %v37
    %v40 = vsub.f32 %v27, %v38
    %v41 = vmul.f32 %v39, %v39
    %v42 = vmul.f32 %v40, %v40
    %v43 = vsel %vm29, %v41, 0.0
    %44 = vadd.xlane.f32.xlu0 %v43
    %v45 = vpop.xlane.xlu0 %44
    %v46 = vsel %vm29, %v42, 0.0
    %47 = vadd.xlane.f32.xlu0 %v46
    %v48 = vpop.xlane.xlu0 %47
    %v49 = vmul.f32 %v45, %v36
    %v50 = vmul.f32 %v48, %v36
    %v51 = vadd.f32 %v49, 1e-05
    %v52 = vadd.f32 %v50, 1e-05
    %v53 = vrsqrt.pop %v51
    %v54 = vrsqrt.pop %v52
    %v55 = vmul.f32 %v39, %v53
    %v56 = vmul.f32 %v40, %v54
    %v58 = vlaneseq
    %v59 = vshrl.u32 %v58, 7
    %v60 = vsub.s32 0, %v59
    %v61 = vrot.slane %v28, %v60
    %v63 = vmul.f32 %v55, %v61
    %v64 = vmul.f32 %v56, %v61
    %65 = vst.msk [vmem:[#allocation5] sm:$0xff] %vm29, %v63
    %66 = vst.msk [vmem:[#allocation5 + $0x8] sm:$0xff] %vm29, %v64
    // Predicated region
    $region14: #{tpu_custom_call.1} parent=1 // pred_check
      _
    $region15: #{tpu_custom_call.1} parent=1 // pred_check_branch
      %68 = sbr.rel (0) target = $region17
    $region16: #{tpu_custom_call.1} parent=1 // pred_region
      %s70 = ssub.s32 256, 256
      %71 = vsyncadd [#allocation4], %s70
      %s72 = sshll.u32 [#allocation5], 4
      %s73 = int_to_ptr.vmem [resolvable:$true] %s72
      %78 = dma.vmem_to_hbm [thread:$0]  %s73, 256, %s2, [#allocation4], 128, 128, 8
    $region17: #{tpu_custom_call.1} parent=1 // pred_fallthru
      _
    // Predicated region
    $region18: #{tpu_custom_call.1} parent=1 // pred_check
      _
    $region19: #{tpu_custom_call.1} parent=1 // pred_check_branch
      %80 = sbr.rel (0) target = $region21
    $region20: #{tpu_custom_call.1} parent=1 // pred_region
      %81 = dma.done [#allocation4], 256
    $region21: #{tpu_custom_call.1} parent=1 // pred_fallthru
      _
    %82 = vsyncpa [#allocation3], 1
    %83 = vsyncpa [#allocation4], 1

</llo_original>
